<compile_context>
chip_gen: v5e
topology: v5e:2x2
jax: 0.10.0
libtpu: 0.0.40
codegen_flags: <defaults>
</compile_context>

<pallas_src>
import functools
import math

import jax
import jax.numpy as jnp
from jax.experimental import pallas as pl
from jax.experimental.pallas import tpu as pltpu


def _downsample_conv_kernel(x_ref, w0_ref, w1_ref, b_ref, o_ref, s0_ref, s1_ref,
                            *, Wo, Cin, chunks):
    """One (Cout-tile, image-block) grid step of the fused stride-2 3x3 conv.

    x_ref : (Nb, Ho+1, 2, Wo+1, 2*Cin)  padded input, W-pixel pairs folded into
                                        channels, H split into (row-pair, parity)
    w0_ref: (3, 2*Cin, tcout)           weights for kw=0|1 (per kernel row kh)
    w1_ref: (3,   Cin, tcout)           weights for kw=2
    b_ref : (1, tcout)                  bias row (f32)
    o_ref : (Nb, Ho, Wo, tcout)         NHWC output tile (lane-dense last dim)
    s0_ref: (Nb, Ho+1, 2, Wo, 2*Cin)    scratch: un-shifted column view
    s1_ref: (Nb, Ho+1, 2, Wo, Cin)      scratch: view shifted by one W-pair
                                        (even-pixel channel half only)
    """
    tcout = o_ref.shape[-1]
    # Hoist the two column-shifted operands once per step (2 copies instead of
    # 6 per-tap relayouts); later taps slice only untiled leading dims.
    s0_ref[...] = x_ref[:, :, :, pl.ds(0, Wo), :]
    s1_ref[...] = x_ref[:, :, :, pl.ds(1, Wo), pl.ds(0, Cin)]
    bias = b_ref[...].astype(jnp.float32)                      # (1, tcout)

    for nb0, nbc, oh0, ohc in chunks:                           # static chunks
        rows = nbc * ohc * Wo
        acc = None
        for kh in range(3):                                     # padded row = 2*oh + kh
            hh, hp = divmod(kh, 2)                              # (row-pair offset, parity)
            t0 = s0_ref[pl.ds(nb0, nbc), pl.ds(oh0 + hh, ohc), hp, :, :]
            t1 = s1_ref[pl.ds(nb0, nbc), pl.ds(oh0 + hh, ohc), hp, :, :]
            part = jnp.dot(t0.reshape(rows, 2 * Cin), w0_ref[kh],
                           preferred_element_type=jnp.float32)
            part = part + jnp.dot(t1.reshape(rows, Cin), w1_ref[kh],
                                  preferred_element_type=jnp.float32)
            acc = part if acc is None else acc + part
        out = (acc + bias).astype(o_ref.dtype)
        o_ref[pl.ds(nb0, nbc), pl.ds(oh0, ohc), :, :] = out.reshape(nbc, ohc, Wo, tcout)


def downsample_conv(x_nchw, weight, bias, *, compute_dtype=None):
    """PyTorch-equivalent nn.Conv2d(C, C, 3, stride=2, padding=1) forward.

    x_nchw: (N, Cin, H, W); weight: (Cout, Cin, 3, 3) [OIHW]; bias: (Cout,)
    returns: (N, Cout, Ho, Wo).
    """
    N, _, H, W = x_nchw.shape
    Cout, Cin, KH, KW = weight.shape
    assert (KH, KW) == (3, 3)
    stride, pad = 2, 1
    Ho = (H + 2 * pad - KH) // stride + 1
    Wo = (W + 2 * pad - KW) // stride + 1

    cdt = jnp.dtype(compute_dtype) if compute_dtype is not None else jnp.dtype(x_nchw.dtype)
    itemsize = cdt.itemsize

    # ---- activations: NCHW -> NHWC, zero-pad, FREE reshape folding W-pixel
    # pairs into channels and H rows into (row-pair, parity).
    # TODO(synk): keep activations NHWC end-to-end in the surrounding model to
    # drop these boundary transposes (each is a full HBM pass done by XLA).
    x = jnp.transpose(x_nchw, (0, 2, 3, 1))
    hp_e, wp_e = 2 * Ho + 2, 2 * Wo + 2
    xp = jnp.pad(x, ((0, 0), (pad, hp_e - pad - H), (pad, wp_e - pad - W), (0, 0)))
    xr = xp.reshape(N, Ho + 1, 2, Wo + 1, 2 * Cin).astype(cdt)

    # ---- weights: OIHW -> two slabs, no structural zeros.
    Cout_p = ((Cout + 127) // 128) * 128                 # lane-dense output stores
    w_t = jnp.transpose(weight, (2, 3, 1, 0))            # (3, 3, Cin, Cout)
    w_t = jnp.pad(w_t, ((0, 0), (0, 0), (0, 0), (0, Cout_p - Cout)))
    w0 = jnp.concatenate([w_t[:, 0], w_t[:, 1]], axis=1).astype(cdt)   # (3, 2Cin, Cout_p)
    w1 = w_t[:, 2].astype(cdt)                                          # (3,  Cin, Cout_p)
    b_row = jnp.pad(bias, (0, Cout_p - Cout)).reshape(1, Cout_p).astype(jnp.float32)

    # ---- Cout tile: largest multiple-of-128 divisor of Cout_p whose
    # double-buffered weight tile fits ~16 MiB (no 128-fallback for Cout=320).
    tcout = 128
    for cand in range(Cout_p, 0, -128):
        if Cout_p % cand == 0 and 2 * 9 * Cin * cand * itemsize <= 16 * 1024 * 1024:
            tcout = cand
            break
    n_co = Cout_p // tcout

    # ---- image blocking: small-spatial layers take several images per step.
    max_rows = 512
    Nb = 1
    if Ho * Wo <= 256:
        target = max(1, max_rows // (Ho * Wo))
        for d in range(min(N, target), 0, -1):
            if N % d == 0:
                Nb = d
                break
    n_blocks = N // Nb

    # ---- static accumulator chunks: keep <= ~512 live output rows per chunk.
    if Nb * Ho * Wo <= max_rows:
        chunks = ((0, Nb, 0, Ho),)
    else:                                               # only reached with Nb == 1
        rows_per = max(1, max_rows // Wo)
        chunks = tuple((0, 1, oh0, min(rows_per, Ho - oh0))
                       for oh0 in range(0, Ho, rows_per))

    # ---- per-layer residency: keep the bigger operand resident across the
    # inner grid axis; the megacore ("parallel") split goes on the outer axis.
    w_bytes_total = 9 * Cin * Cout_p * itemsize
    x_block_bytes = Nb * (Ho + 1) * 2 * (Wo + 1) * 2 * Cin * itemsize
    weight_resident = w_bytes_total > x_block_bytes

    x_blk = (Nb, Ho + 1, 2, Wo + 1, 2 * Cin)
    o_blk = (Nb, Ho, Wo, tcout)
    if weight_resident:
        grid = (n_co, n_blocks)                         # co outer, n inner
        x_spec = pl.BlockSpec(x_blk, lambda co, n: (n, 0, 0, 0, 0))
        w0_spec = pl.BlockSpec((3, 2 * Cin, tcout), lambda co, n: (0, 0, co))
        w1_spec = pl.BlockSpec((3, Cin, tcout), lambda co, n: (0, 0, co))
        b_spec = pl.BlockSpec((1, tcout), lambda co, n: (0, co))
        o_spec = pl.BlockSpec(o_blk, lambda co, n: (n, 0, 0, co))
    else:
        grid = (n_blocks, n_co)                         # n outer, co inner
        x_spec = pl.BlockSpec(x_blk, lambda n, co: (n, 0, 0, 0, 0))
        w0_spec = pl.BlockSpec((3, 2 * Cin, tcout), lambda n, co: (0, 0, co))
        w1_spec = pl.BlockSpec((3, Cin, tcout), lambda n, co: (0, 0, co))
        b_spec = pl.BlockSpec((1, tcout), lambda n, co: (0, co))
        o_spec = pl.BlockSpec(o_blk, lambda n, co: (n, 0, 0, co))

    kernel = functools.partial(_downsample_conv_kernel, Wo=Wo, Cin=Cin, chunks=chunks)

    # ---- VMEM budget from the actual resident set (double-buffered blocks +
    # hoisted scratch + one chunk-sized f32 accumulator), with headroom.
    s_bytes = Nb * (Ho + 1) * 2 * Wo * 3 * Cin * itemsize
    acc_bytes = max(nbc * ohc for _, nbc, _, ohc in chunks) * Wo * tcout * 4
    o_block_bytes = Nb * Ho * Wo * tcout * itemsize
    w_block_bytes = 9 * Cin * tcout * itemsize
    est = 2 * (x_block_bytes + w_block_bytes + o_block_bytes) + s_bytes + acc_bytes
    vmem_limit = min(100 * 1024 * 1024, max(32 * 1024 * 1024, int(est * 1.3)))

    flops = 2 * N * Ho * Wo * 9 * Cin * Cout_p          # real MXU work (no zero slab)
    bytes_accessed = ((xr.size + w0.size + w1.size) * itemsize
                      + b_row.size * 4 + N * Ho * Wo * Cout_p * itemsize)

    out = pl.pallas_call(
        kernel,
        out_shape=jax.ShapeDtypeStruct((N, Ho, Wo, Cout_p), cdt),
        grid_spec=pltpu.PrefetchScalarGridSpec(
            num_scalar_prefetch=0,
            grid=grid,
            in_specs=[x_spec, w0_spec, w1_spec, b_spec],
            out_specs=o_spec,
            scratch_shapes=[
                pltpu.VMEM((Nb, Ho + 1, 2, Wo, 2 * Cin), cdt),   # un-shifted view
                pltpu.VMEM((Nb, Ho + 1, 2, Wo, Cin), cdt),       # shifted view
            ]),
        compiler_params=pltpu.CompilerParams(
            dimension_semantics=("parallel", "arbitrary"),
            vmem_limit_bytes=vmem_limit,
        ),
        cost_estimate=pl.CostEstimate(flops=flops, transcendentals=0,
                                      bytes_accessed=bytes_accessed),
    )(xr, w0, w1, b_row)

    out = out[..., :Cout]                               # drop Cout lane padding
    return jnp.transpose(out, (0, 3, 1, 2))             # back to NCHW


def _reference(x, weight, bias):
    Cout = weight.shape[0]
    return jax.lax.conv_general_dilated(
        x, weight, window_strides=(2, 2), padding=((1, 1), (1, 1)),
        dimension_numbers=("NCHW", "OIHW", "NCHW"),
        precision=jax.lax.Precision.HIGHEST) + bias.reshape(1, Cout, 1, 1)


if __name__ == "__main__":
    key = jax.random.PRNGKey(0)
    kx, kw, kb = jax.random.split(key, 3)

    # nn.Conv2d(C, C, 3, stride=2, padding=1) params
    N, C, H, W = 2, 4, 16, 16
    fan_in = C * 3 * 3
    bound = 1.0 / math.sqrt(fan_in)
    weight = jax.random.uniform(kw, (C, C, 3, 3), jnp.float32, -bound, bound)
    bias = jax.random.uniform(kb, (C,), jnp.float32, -bound, bound)

    # Test 1: weight-resident path, Nb=2 image block, single accumulator chunk.
    x = jax.random.normal(kx, (N, C, H, W), jnp.float32)
    out = jax.block_until_ready(jax.jit(downsample_conv)(x, weight, bias))
    ref = _reference(x, weight, bias)
    assert out.shape == (N, C, H // 2, W // 2), out.shape
    assert jnp.allclose(out, ref, atol=1e-2, rtol=1e-2), \
        float(jnp.max(jnp.abs(out - ref)))

    # Test 2: image-resident path, multi-chunk accumulator (Ho*Wo > 512).
    x2 = jax.random.normal(kx, (1, C, 48, 48), jnp.float32)
    out2 = jax.block_until_ready(jax.jit(downsample_conv)(x2, weight, bias))
    ref2 = _reference(x2, weight, bias)
    assert out2.shape == (1, C, 24, 24), out2.shape
    assert jnp.allclose(out2, ref2, atol=1e-2, rtol=1e-2), \
        float(jnp.max(jnp.abs(out2 - ref2)))

    print("KERNEL_OK")
</pallas_src>

<mosaic_0001>
module attributes {stable_mosaic.version = 11 : i64} {
  func.func @_downsample_conv_kernel(%arg0: i32, %arg1: i32, %arg2: memref<2x9x2x9x8xf32, #tpu.memory_space<vmem>>, %arg3: memref<3x8x128xf32, #tpu.memory_space<vmem>>, %arg4: memref<3x4x128xf32, #tpu.memory_space<vmem>>, %arg5: memref<1x128xf32, #tpu.memory_space<vmem>>, %arg6: memref<2x8x8x128xf32, #tpu.memory_space<vmem>>, %arg7: memref<2x9x2x8x8xf32, #tpu.memory_space<vmem>>, %arg8: memref<2x9x2x8x4xf32, #tpu.memory_space<vmem>>) attributes {dimension_semantics = [#tpu.dimension_semantics<parallel>, #tpu.dimension_semantics<arbitrary>], iteration_bounds = array<i64: 1, 1>, scalar_prefetch = 0 : i64, scratch_operands = 2 : i64, tpu.core_type = #tpu.core_type<tc>, window_params = [{transform_indices = @transform_0, window_bounds = array<i64: 2, 9, 2, 9, 8>}, {transform_indices = @transform_1, window_bounds = array<i64: 3, 8, 128>}, {transform_indices = @transform_2, window_bounds = array<i64: 3, 4, 128>}, {transform_indices = @transform_3, window_bounds = array<i64: 1, 128>}, {transform_indices = @transform_4, window_bounds = array<i64: 2, 8, 8, 128>}]} {
    %c0 = arith.constant 0 : index
    %c0_0 = arith.constant 0 : index
    %c0_1 = arith.constant 0 : index
    %c0_2 = arith.constant 0 : index
    %c0_3 = arith.constant 0 : index
    %0 = vector.load %arg2[%c0, %c0_0, %c0_1, %c0_2, %c0_3] : memref<2x9x2x9x8xf32, #tpu.memory_space<vmem>>, vector<2x9x2x8x8xf32>
    %c0_4 = arith.constant 0 : index
    %c0_5 = arith.constant 0 : index
    %c0_6 = arith.constant 0 : index
    %c0_7 = arith.constant 0 : index
    %c0_8 = arith.constant 0 : index
    %1 = vector.load %arg7[%c0_4, %c0_5, %c0_6, %c0_7, %c0_8] : memref<2x9x2x8x8xf32, #tpu.memory_space<vmem>>, vector<2x9x2x8x8xf32>
    tpu.vector_store %arg7[%c0_4, %c0_5, %c0_6, %c0_7, %c0_8], %0 {strides = array<i32>} : memref<2x9x2x8x8xf32, #tpu.memory_space<vmem>>, vector<2x9x2x8x8xf32>,
    %c0_9 = arith.constant 0 : index
    %c0_10 = arith.constant 0 : index
    %c0_11 = arith.constant 0 : index
    %c1 = arith.constant 1 : index
    %c0_12 = arith.constant 0 : index
    %2 = vector.load %arg2[%c0_9, %c0_10, %c0_11, %c1, %c0_12] : memref<2x9x2x9x8xf32, #tpu.memory_space<vmem>>, vector<2x9x2x8x4xf32>
    %c0_13 = arith.constant 0 : index
    %c0_14 = arith.constant 0 : index
    %c0_15 = arith.constant 0 : index
    %c0_16 = arith.constant 0 : index
    %c0_17 = arith.constant 0 : index
    %3 = vector.load %arg8[%c0_13, %c0_14, %c0_15, %c0_16, %c0_17] : memref<2x9x2x8x4xf32, #tpu.memory_space<vmem>>, vector<2x9x2x8x4xf32>
    tpu.vector_store %arg8[%c0_13, %c0_14, %c0_15, %c0_16, %c0_17], %2 {strides = array<i32>} : memref<2x9x2x8x4xf32, #tpu.memory_space<vmem>>, vector<2x9x2x8x4xf32>,
    %c0_18 = arith.constant 0 : index
    %c0_19 = arith.constant 0 : index
    %4 = vector.load %arg5[%c0_18, %c0_19] : memref<1x128xf32, #tpu.memory_space<vmem>>, vector<1x128xf32>
    %c0_20 = arith.constant 0 : index
    %c0_21 = arith.constant 0 : index
    %c0_22 = arith.constant 0 : index
    %c0_23 = arith.constant 0 : index
    %c0_24 = arith.constant 0 : index
    %5 = vector.load %arg7[%c0_20, %c0_21, %c0_22, %c0_23, %c0_24] : memref<2x9x2x8x8xf32, #tpu.memory_space<vmem>>, vector<2x8x1x8x8xf32>
    %6 = vector.shape_cast %5 : vector<2x8x1x8x8xf32> to vector<2x8x8x8xf32>
    %c0_25 = arith.constant 0 : index
    %c0_26 = arith.constant 0 : index
    %c0_27 = arith.constant 0 : index
    %c0_28 = arith.constant 0 : index
    %c0_29 = arith.constant 0 : index
    %7 = vector.load %arg8[%c0_25, %c0_26, %c0_27, %c0_28, %c0_29] : memref<2x9x2x8x4xf32, #tpu.memory_space<vmem>>, vector<2x8x1x8x4xf32>
    %8 = vector.shape_cast %7 : vector<2x8x1x8x4xf32> to vector<2x8x8x4xf32>
    %9 = vector.shape_cast %6 : vector<2x8x8x8xf32> to vector<128x8xf32>
    %c0_30 = arith.constant 0 : index
    %c0_31 = arith.constant 0 : index
    %c0_32 = arith.constant 0 : index
    %10 = vector.load %arg3[%c0_30, %c0_31, %c0_32] : memref<3x8x128xf32, #tpu.memory_space<vmem>>, vector<1x8x128xf32>
    %11 = vector.shape_cast %10 : vector<1x8x128xf32> to vector<8x128xf32>
    %cst = arith.constant dense<0.000000e+00> : vector<128x128xf32>
    %12 = tpu.matmul %9, %11, %cst {dimension_numbers = #tpu.dot_dimension_numbers<[1], [0], [0], [1], [0, 0, 1, 1], [], []>} : vector<128x8xf32>, vector<8x128xf32>, vector<128x128xf32> -> vector<128x128xf32>
    %13 = vector.shape_cast %8 : vector<2x8x8x4xf32> to vector<128x4xf32>
    %c0_33 = arith.constant 0 : index
    %c0_34 = arith.constant 0 : index
    %c0_35 = arith.constant 0 : index
    %14 = vector.load %arg4[%c0_33, %c0_34, %c0_35] : memref<3x4x128xf32, #tpu.memory_space<vmem>>, vector<1x4x128xf32>
    %15 = vector.shape_cast %14 : vector<1x4x128xf32> to vector<4x128xf32>
    %cst_36 = arith.constant dense<0.000000e+00> : vector<128x128xf32>
    %16 = tpu.matmul %13, %15, %cst_36 {dimension_numbers = #tpu.dot_dimension_numbers<[1], [0], [0], [1], [0, 0, 1, 1], [], []>} : vector<128x4xf32>, vector<4x128xf32>, vector<128x128xf32> -> vector<128x128xf32>
    %17 = arith.addf %12, %16 : vector<128x128xf32>
    %c0_37 = arith.constant 0 : index
    %c0_38 = arith.constant 0 : index
    %c1_39 = arith.constant 1 : index
    %c0_40 = arith.constant 0 : index
    %c0_41 = arith.constant 0 : index
    %18 = vector.load %arg7[%c0_37, %c0_38, %c1_39, %c0_40, %c0_41] : memref<2x9x2x8x8xf32, #tpu.memory_space<vmem>>, vector<2x8x1x8x8xf32>
    %19 = vector.shape_cast %18 : vector<2x8x1x8x8xf32> to vector<2x8x8x8xf32>
    %c0_42 = arith.constant 0 : index
    %c0_43 = arith.constant 0 : index
    %c1_44 = arith.constant 1 : index
    %c0_45 = arith.constant 0 : index
    %c0_46 = arith.constant 0 : index
    %20 = vector.load %arg8[%c0_42, %c0_43, %c1_44, %c0_45, %c0_46] : memref<2x9x2x8x4xf32, #tpu.memory_space<vmem>>, vector<2x8x1x8x4xf32>
    %21 = vector.shape_cast %20 : vector<2x8x1x8x4xf32> to vector<2x8x8x4xf32>
    %22 = vector.shape_cast %19 : vector<2x8x8x8xf32> to vector<128x8xf32>
    %c1_47 = arith.constant 1 : index
    %c0_48 = arith.constant 0 : index
    %c0_49 = arith.constant 0 : index
    %23 = vector.load %arg3[%c1_47, %c0_48, %c0_49] : memref<3x8x128xf32, #tpu.memory_space<vmem>>, vector<1x8x128xf32>
    %24 = vector.shape_cast %23 : vector<1x8x128xf32> to vector<8x128xf32>
    %cst_50 = arith.constant dense<0.000000e+00> : vector<128x128xf32>
    %25 = tpu.matmul %22, %24, %cst_50 {dimension_numbers = #tpu.dot_dimension_numbers<[1], [0], [0], [1], [0, 0, 1, 1], [], []>} : vector<128x8xf32>, vector<8x128xf32>, vector<128x128xf32> -> vector<128x128xf32>
    %26 = vector.shape_cast %21 : vector<2x8x8x4xf32> to vector<128x4xf32>
    %c1_51 = arith.constant 1 : index
    %c0_52 = arith.constant 0 : index
    %c0_53 = arith.constant 0 : index
    %27 = vector.load %arg4[%c1_51, %c0_52, %c0_53] : memref<3x4x128xf32, #tpu.memory_space<vmem>>, vector<1x4x128xf32>
    %28 = vector.shape_cast %27 : vector<1x4x128xf32> to vector<4x128xf32>
    %cst_54 = arith.constant dense<0.000000e+00> : vector<128x128xf32>
    %29 = tpu.matmul %26, %28, %cst_54 {dimension_numbers = #tpu.dot_dimension_numbers<[1], [0], [0], [1], [0, 0, 1, 1], [], []>} : vector<128x4xf32>, vector<4x128xf32>, vector<128x128xf32> -> vector<128x128xf32>
    %30 = arith.addf %25, %29 : vector<128x128xf32>
    %31 = arith.addf %17, %30 : vector<128x128xf32>
    %c0_55 = arith.constant 0 : index
    %c1_56 = arith.constant 1 : index
    %c0_57 = arith.constant 0 : index
    %c0_58 = arith.constant 0 : index
    %c0_59 = arith.constant 0 : index
    %32 = vector.load %arg7[%c0_55, %c1_56, %c0_57, %c0_58, %c0_59] : memref<2x9x2x8x8xf32, #tpu.memory_space<vmem>>, vector<2x8x1x8x8xf32>
    %33 = vector.shape_cast %32 : vector<2x8x1x8x8xf32> to vector<2x8x8x8xf32>
    %c0_60 = arith.constant 0 : index
    %c1_61 = arith.constant 1 : index
    %c0_62 = arith.constant 0 : index
    %c0_63 = arith.constant 0 : index
    %c0_64 = arith.constant 0 : index
    %34 = vector.load %arg8[%c0_60, %c1_61, %c0_62, %c0_63, %c0_64] : memref<2x9x2x8x4xf32, #tpu.memory_space<vmem>>, vector<2x8x1x8x4xf32>
    %35 = vector.shape_cast %34 : vector<2x8x1x8x4xf32> to vector<2x8x8x4xf32>
    %36 = vector.shape_cast %33 : vector<2x8x8x8xf32> to vector<128x8xf32>
    %c2 = arith.constant 2 : index
    %c0_65 = arith.constant 0 : index
    %c0_66 = arith.constant 0 : index
    %37 = vector.load %arg3[%c2, %c0_65, %c0_66] : memref<3x8x128xf32, #tpu.memory_space<vmem>>, vector<1x8x128xf32>
    %38 = vector.shape_cast %37 : vector<1x8x128xf32> to vector<8x128xf32>
    %cst_67 = arith.constant dense<0.000000e+00> : vector<128x128xf32>
    %39 = tpu.matmul %36, %38, %cst_67 {dimension_numbers = #tpu.dot_dimension_numbers<[1], [0], [0], [1], [0, 0, 1, 1], [], []>} : vector<128x8xf32>, vector<8x128xf32>, vector<128x128xf32> -> vector<128x128xf32>
    %40 = vector.shape_cast %35 : vector<2x8x8x4xf32> to vector<128x4xf32>
    %c2_68 = arith.constant 2 : index
    %c0_69 = arith.constant 0 : index
    %c0_70 = arith.constant 0 : index
    %41 = vector.load %arg4[%c2_68, %c0_69, %c0_70] : memref<3x4x128xf32, #tpu.memory_space<vmem>>, vector<1x4x128xf32>
    %42 = vector.shape_cast %41 : vector<1x4x128xf32> to vector<4x128xf32>
    %cst_71 = arith.constant dense<0.000000e+00> : vector<128x128xf32>
    %43 = tpu.matmul %40, %42, %cst_71 {dimension_numbers = #tpu.dot_dimension_numbers<[1], [0], [0], [1], [0, 0, 1, 1], [], []>} : vector<128x4xf32>, vector<4x128xf32>, vector<128x128xf32> -> vector<128x128xf32>
    %44 = arith.addf %39, %43 : vector<128x128xf32>
    %45 = arith.addf %31, %44 : vector<128x128xf32>
    %46 = vector.broadcast %4 : vector<1x128xf32> to vector<128x128xf32>
    %47 = arith.addf %45, %46 : vector<128x128xf32>
    %48 = vector.shape_cast %47 : vector<128x128xf32> to vector<2x8x8x128xf32>
    %c0_72 = arith.constant 0 : index
    %c0_73 = arith.constant 0 : index
    %c0_74 = arith.constant 0 : index
    %c0_75 = arith.constant 0 : index
    %49 = vector.load %arg6[%c0_72, %c0_73, %c0_74, %c0_75] : memref<2x8x8x128xf32, #tpu.memory_space<vmem>>, vector<2x8x8x128xf32>
    tpu.vector_store %arg6[%c0_72, %c0_73, %c0_74, %c0_75], %48 {strides = array<i32>} : memref<2x8x8x128xf32, #tpu.memory_space<vmem>>, vector<2x8x8x128xf32>,
    return
  }
  func.func @transform_0(%arg0: i32, %arg1: i32) -> (i32, i32, i32, i32, i32) {
    %c0_i32 = arith.constant 0 : i32
    %c0_i32_0 = arith.constant 0 : i32
    %c0_i32_1 = arith.constant 0 : i32
    %c0_i32_2 = arith.constant 0 : i32
    %c0_i32_3 = arith.constant 0 : i32
    return %arg1, %c0_i32, %c0_i32_0, %c0_i32_1, %c0_i32_2 : i32, i32, i32, i32, i32
  }
  func.func @transform_1(%arg0: i32, %arg1: i32) -> (i32, i32, i32) {
    %c0_i32 = arith.constant 0 : i32
    %c0_i32_0 = arith.constant 0 : i32
    %c0_i32_1 = arith.constant 0 : i32
    return %c0_i32, %c0_i32_0, %arg0 : i32, i32, i32
  }
  func.func @transform_2(%arg0: i32, %arg1: i32) -> (i32, i32, i32) {
    %c0_i32 = arith.constant 0 : i32
    %c0_i32_0 = arith.constant 0 : i32
    %c0_i32_1 = arith.constant 0 : i32
    return %c0_i32, %c0_i32_0, %arg0 : i32, i32, i32
  }
  func.func @transform_3(%arg0: i32, %arg1: i32) -> (i32, i32) {
    %c0_i32 = arith.constant 0 : i32
    %c0_i32_0 = arith.constant 0 : i32
    return %c0_i32, %arg0 : i32, i32
  }
  func.func @transform_4(%arg0: i32, %arg1: i32) -> (i32, i32, i32, i32) {
    %c0_i32 = arith.constant 0 : i32
    %c0_i32_0 = arith.constant 0 : i32
    %c0_i32_1 = arith.constant 0 : i32
    return %arg1, %c0_i32, %c0_i32_0, %arg0 : i32, i32, i32, i32
  }
}

</mosaic_0001>

<llo_original>
// kernel: downsample_conv.1
$region0: #{downsample_conv.1}
  #allocation0 [shape = 'u32[]', space=smem, size = 0x4, offset = 0x4, fixed_abs, tag = 'smem constant byte address 0x4 - core index']
  #allocation1 [shape = 'u32[72,128]{1,0:T(1,128)}', space=vmem, size = 0x9000, scoped, tag = 'internal scratch']
  #allocation2 [shape = 'f32[2,9,2,8,8]{4,3,2,1,0:T(8,128)}', space=vmem, size = 0x24000, scoped, tag = 'scratch operand']
  #allocation3 [shape = 'f32[2,9,2,8,4]{4,3,2,1,0:T(8,128)}', space=vmem, size = 0x24000, scoped, tag = 'scratch operand']
  %s0 = inlined_call_operand.vmem [shape: f32[2,9,2,9,8], index: 0, kind: input, shape index: {}]
  %s1 = inlined_call_operand.vmem [shape: f32[3,8,128], index: 1, kind: input, shape index: {}]
  %s2 = inlined_call_operand.vmem [shape: f32[3,4,128], index: 2, kind: input, shape index: {}]
  %s3 = inlined_call_operand.vmem [shape: f32[1,128], index: 3, kind: input, shape index: {}]
  %s4 = inlined_call_operand.vmem [shape: f32[2,8,8,128], index: 4, kind: output, shape index: {}]
  %s5 = sld [smem:[#allocation0]]
  $region26: #{downsample_conv.1} parent=0
    _
  %s7 = ssub.s32 1, %s5
  %s8 = scalar_select 0, %s7, %s5
  // Predicated region
  $region2: #{downsample_conv.1} parent=0 // pred_check
    _
  $region3: #{downsample_conv.1} parent=0 // pred_check_branch
    %10 = sbr.rel (0) target = $region5
  $region4: #{downsample_conv.1} parent=0 // pred_region
    _
  $region5: #{downsample_conv.1} parent=0 // pred_fallthru
    _
  // Predicated region
  $region6: #{downsample_conv.1} parent=0 // pred_check
    _
  $region7: #{downsample_conv.1} parent=0 // pred_check_branch
    %12 = sbr.rel (0) target = $region9
  $region8: #{downsample_conv.1} parent=0 // pred_region
    _
  $region9: #{downsample_conv.1} parent=0 // pred_fallthru
    _
  // Predicated region
  $region10: #{downsample_conv.1} parent=0 // pred_check
    _
  $region11: #{downsample_conv.1} parent=0 // pred_check_branch
    %14 = sbr.rel (0) target = $region13
  $region12: #{downsample_conv.1} parent=0 // pred_region
    _
  $region13: #{downsample_conv.1} parent=0 // pred_fallthru
    _
  // Predicated region
  $region14: #{downsample_conv.1} parent=0 // pred_check
    _
  $region15: #{downsample_conv.1} parent=0 // pred_check_branch
    %16 = sbr.rel (0) target = $region17
  $region16: #{downsample_conv.1} parent=0 // pred_region
    _
  $region17: #{downsample_conv.1} parent=0 // pred_fallthru
    _
  %v17 = vld [vmem:[%s0] sm:$0xff]
  %v18 = vld [vmem:[%s0 + $0x10] sm:$0xff]
  %v19 = vld [vmem:[%s0 + $0x20] sm:$0xff]
  %v20 = vld [vmem:[%s0 + $0x30] sm:$0xff]
  %v21 = vld [vmem:[%s0 + $0x40] sm:$0xff]
  %v22 = vld [vmem:[%s0 + $0x50] sm:$0xff]
  %v23 = vld [vmem:[%s0 + $0x60] sm:$0xff]
  %v24 = vld [vmem:[%s0 + $0x70] sm:$0xff]
  %v25 = vld [vmem:[%s0 + $0x80] sm:$0xff]
  %v26 = vld [vmem:[%s0 + $0x90] sm:$0xff]
  %v27 = vld [vmem:[%s0 + $0xa0] sm:$0xff]
  %v28 = vld [vmem:[%s0 + $0xb0] sm:$0xff]
  %v29 = vld [vmem:[%s0 + $0xc0] sm:$0xff]
  %v30 = vld [vmem:[%s0 + $0xd0] sm:$0xff]
  %v31 = vld [vmem:[%s0 + $0xe0] sm:$0xff]
  %v32 = vld [vmem:[%s0 + $0xf0] sm:$0xff]
  %v33 = vld [vmem:[%s0 + $0x100] sm:$0xff]
  %v34 = vld [vmem:[%s0 + $0x110] sm:$0xff]
  %v35 = vld [vmem:[%s0 + $0x120] sm:$0xff]
  %v36 = vld [vmem:[%s0 + $0x130] sm:$0xff]
  %v37 = vld [vmem:[%s0 + $0x140] sm:$0xff]
  %v38 = vld [vmem:[%s0 + $0x150] sm:$0xff]
  %v39 = vld [vmem:[%s0 + $0x160] sm:$0xff]
  %v40 = vld [vmem:[%s0 + $0x170] sm:$0xff]
  %v41 = vld [vmem:[%s0 + $0x180] sm:$0xff]
  %v42 = vld [vmem:[%s0 + $0x190] sm:$0xff]
  %v43 = vld [vmem:[%s0 + $0x1a0] sm:$0xff]
  %v44 = vld [vmem:[%s0 + $0x1b0] sm:$0xff]
  %v45 = vld [vmem:[%s0 + $0x1c0] sm:$0xff]
  %v46 = vld [vmem:[%s0 + $0x1d0] sm:$0xff]
  %v47 = vld [vmem:[%s0 + $0x1e0] sm:$0xff]
  %v48 = vld [vmem:[%s0 + $0x1f0] sm:$0xff]
  %v49 = vld [vmem:[%s0 + $0x200] sm:$0xff]
  %v50 = vld [vmem:[%s0 + $0x210] sm:$0xff]
  %v51 = vld [vmem:[%s0 + $0x220] sm:$0xff]
  %v52 = vld [vmem:[%s0 + $0x230] sm:$0xff]
  %vm53 = vcmask 64512
  %54 = vst.msk [vmem:[#allocation2] sm:$0xff] %vm53, %v17
  %55 = vst.msk [vmem:[#allocation2 + $0x8] sm:$0xff] %vm53, %v18
  %56 = vst.msk [vmem:[#allocation2 + $0x10] sm:$0xff] %vm53, %v19
  %57 = vst.msk [vmem:[#allocation2 + $0x18] sm:$0xff] %vm53, %v20
  %58 = vst.msk [vmem:[#allocation2 + $0x20] sm:$0xff] %vm53, %v21
  %59 = vst.msk [vmem:[#allocation2 + $0x28] sm:$0xff] %vm53, %v22
  %60 = vst.msk [vmem:[#allocation2 + $0x30] sm:$0xff] %vm53, %v23
  %61 = vst.msk [vmem:[#allocation2 + $0x38] sm:$0xff] %vm53, %v24
  %62 = vst.msk [vmem:[#allocation2 + $0x40] sm:$0xff] %vm53, %v25
  %63 = vst.msk [vmem:[#allocation2 + $0x48] sm:$0xff] %vm53, %v26
  %64 = vst.msk [vmem:[#allocation2 + $0x50] sm:$0xff] %vm53, %v27
  %65 = vst.msk [vmem:[#allocation2 + $0x58] sm:$0xff] %vm53, %v28
  %66 = vst.msk [vmem:[#allocation2 + $0x60] sm:$0xff] %vm53, %v29
  %67 = vst.msk [vmem:[#allocation2 + $0x68] sm:$0xff] %vm53, %v30
  %68 = vst.msk [vmem:[#allocation2 + $0x70] sm:$0xff] %vm53, %v31
  %69 = vst.msk [vmem:[#allocation2 + $0x78] sm:$0xff] %vm53, %v32
  %70 = vst.msk [vmem:[#allocation2 + $0x80] sm:$0xff] %vm53, %v33
  %71 = vst.msk [vmem:[#allocation2 + $0x88] sm:$0xff] %vm53, %v34
  %72 = vst.msk [vmem:[#allocation2 + $0x90] sm:$0xff] %vm53, %v35
  %73 = vst.msk [vmem:[#allocation2 + $0x98] sm:$0xff] %vm53, %v36
  %74 = vst.msk [vmem:[#allocation2 + $0xa0] sm:$0xff] %vm53, %v37
  %75 = vst.msk [vmem:[#allocation2 + $0xa8] sm:$0xff] %vm53, %v38
  %76 = vst.msk [vmem:[#allocation2 + $0xb0] sm:$0xff] %vm53, %v39
  %77 = vst.msk [vmem:[#allocation2 + $0xb8] sm:$0xff] %vm53, %v40
  %78 = vst.msk [vmem:[#allocation2 + $0xc0] sm:$0xff] %vm53, %v41
  %79 = vst.msk [vmem:[#allocation2 + $0xc8] sm:$0xff] %vm53, %v42
  %80 = vst.msk [vmem:[#allocation2 + $0xd0] sm:$0xff] %vm53, %v43
  %81 = vst.msk [vmem:[#allocation2 + $0xd8] sm:$0xff] %vm53, %v44
  %82 = vst.msk [vmem:[#allocation2 + $0xe0] sm:$0xff] %vm53, %v45
  %83 = vst.msk [vmem:[#allocation2 + $0xe8] sm:$0xff] %vm53, %v46
  %84 = vst.msk [vmem:[#allocation2 + $0xf0] sm:$0xff] %vm53, %v47
  %85 = vst.msk [vmem:[#allocation2 + $0xf8] sm:$0xff] %vm53, %v48
  %86 = vst.msk [vmem:[#allocation2 + $0x100] sm:$0xff] %vm53, %v49
  %87 = vst.msk [vmem:[#allocation2 + $0x108] sm:$0xff] %vm53, %v50
  %88 = vst.msk [vmem:[#allocation2 + $0x110] sm:$0xff] %vm53, %v51
  %89 = vst.msk [vmem:[#allocation2 + $0x118] sm:$0xff] %vm53, %v52
  %v90 = vld [vmem:[%s0 + $0x1] sm:$0xff]
  %v91 = vld [vmem:[%s0 + $0x11] sm:$0xff]
  %v92 = vld [vmem:[%s0 + $0x21] sm:$0xff]
  %v93 = vld [vmem:[%s0 + $0x31] sm:$0xff]
  %v94 = vld [vmem:[%s0 + $0x41] sm:$0xff]
  %v95 = vld [vmem:[%s0 + $0x51] sm:$0xff]
  %v96 = vld [vmem:[%s0 + $0x61] sm:$0xff]
  %v97 = vld [vmem:[%s0 + $0x71] sm:$0xff]
  %v98 = vld [vmem:[%s0 + $0x81] sm:$0xff]
  %v99 = vld [vmem:[%s0 + $0x91] sm:$0xff]
  %v100 = vld [vmem:[%s0 + $0xa1] sm:$0xff]
  %v101 = vld [vmem:[%s0 + $0xb1] sm:$0xff]
  %v102 = vld [vmem:[%s0 + $0xc1] sm:$0xff]
  %v103 = vld [vmem:[%s0 + $0xd1] sm:$0xff]
  %v104 = vld [vmem:[%s0 + $0xe1] sm:$0xff]
  %v105 = vld [vmem:[%s0 + $0xf1] sm:$0xff]
  %v106 = vld [vmem:[%s0 + $0x101] sm:$0xff]
  %v107 = vld [vmem:[%s0 + $0x111] sm:$0xff]
  %v108 = vld [vmem:[%s0 + $0x121] sm:$0xff]
  %v109 = vld [vmem:[%s0 + $0x131] sm:$0xff]
  %v110 = vld [vmem:[%s0 + $0x141] sm:$0xff]
  %v111 = vld [vmem:[%s0 + $0x151] sm:$0xff]
  %v112 = vld [vmem:[%s0 + $0x161] sm:$0xff]
  %v113 = vld [vmem:[%s0 + $0x171] sm:$0xff]
  %v114 = vld [vmem:[%s0 + $0x181] sm:$0xff]
  %v115 = vld [vmem:[%s0 + $0x191] sm:$0xff]
  %v116 = vld [vmem:[%s0 + $0x1a1] sm:$0xff]
  %v117 = vld [vmem:[%s0 + $0x1b1] sm:$0xff]
  %v118 = vld [vmem:[%s0 + $0x1c1] sm:$0xff]
  %v119 = vld [vmem:[%s0 + $0x1d1] sm:$0xff]
  %v120 = vld [vmem:[%s0 + $0x1e1] sm:$0xff]
  %v121 = vld [vmem:[%s0 + $0x1f1] sm:$0xff]
  %v122 = vld [vmem:[%s0 + $0x201] sm:$0xff]
  %v123 = vld [vmem:[%s0 + $0x211] sm:$0xff]
  %v124 = vld [vmem:[%s0 + $0x221] sm:$0xff]
  %v125 = vld [vmem:[%s0 + $0x231] sm:$0xff]
  %vm126 = vcmask 31744
  %127 = vst.msk [vmem:[#allocation3] sm:$0xff] %vm126, %v90
  %128 = vst.msk [vmem:[#allocation3 + $0x8] sm:$0xff] %vm126, %v91
  %129 = vst.msk [vmem:[#allocation3 + $0x10] sm:$0xff] %vm126, %v92
  %130 = vst.msk [vmem:[#allocation3 + $0x18] sm:$0xff] %vm126, %v93
  %131 = vst.msk [vmem:[#allocation3 + $0x20] sm:$0xff] %vm126, %v94
  %132 = vst.msk [vmem:[#allocation3 + $0x28] sm:$0xff] %vm126, %v95
  %133 = vst.msk [vmem:[#allocation3 + $0x30] sm:$0xff] %vm126, %v96
  %134 = vst.msk [vmem:[#allocation3 + $0x38] sm:$0xff] %vm126, %v97
  %135 = vst.msk [vmem:[#allocation3 + $0x40] sm:$0xff] %vm126, %v98
  %136 = vst.msk [vmem:[#allocation3 + $0x48] sm:$0xff] %vm126, %v99
  %137 = vst.msk [vmem:[#allocation3 + $0x50] sm:$0xff] %vm126, %v100
  %138 = vst.msk [vmem:[#allocation3 + $0x58] sm:$0xff] %vm126, %v101
  %139 = vst.msk [vmem:[#allocation3 + $0x60] sm:$0xff] %vm126, %v102
  %140 = vst.msk [vmem:[#allocation3 + $0x68] sm:$0xff] %vm126, %v103
  %141 = vst.msk [vmem:[#allocation3 + $0x70] sm:$0xff] %vm126, %v104
  %142 = vst.msk [vmem:[#allocation3 + $0x78] sm:$0xff] %vm126, %v105
  %143 = vst.msk [vmem:[#allocation3 + $0x80] sm:$0xff] %vm126, %v106
  %144 = vst.msk [vmem:[#allocation3 + $0x88] sm:$0xff] %vm126, %v107
  %145 = vst.msk [vmem:[#allocation3 + $0x90] sm:$0xff] %vm126, %v108
  %146 = vst.msk [vmem:[#allocation3 + $0x98] sm:$0xff] %vm126, %v109
  %147 = vst.msk [vmem:[#allocation3 + $0xa0] sm:$0xff] %vm126, %v110
  %148 = vst.msk [vmem:[#allocation3 + $0xa8] sm:$0xff] %vm126, %v111
  %149 = vst.msk [vmem:[#allocation3 + $0xb0] sm:$0xff] %vm126, %v112
  %150 = vst.msk [vmem:[#allocation3 + $0xb8] sm:$0xff] %vm126, %v113
  %151 = vst.msk [vmem:[#allocation3 + $0xc0] sm:$0xff] %vm126, %v114
  %152 = vst.msk [vmem:[#allocation3 + $0xc8] sm:$0xff] %vm126, %v115
  %153 = vst.msk [vmem:[#allocation3 + $0xd0] sm:$0xff] %vm126, %v116
  %154 = vst.msk [vmem:[#allocation3 + $0xd8] sm:$0xff] %vm126, %v117
  %155 = vst.msk [vmem:[#allocation3 + $0xe0] sm:$0xff] %vm126, %v118
  %156 = vst.msk [vmem:[#allocation3 + $0xe8] sm:$0xff] %vm126, %v119
  %157 = vst.msk [vmem:[#allocation3 + $0xf0] sm:$0xff] %vm126, %v120
  %158 = vst.msk [vmem:[#allocation3 + $0xf8] sm:$0xff] %vm126, %v121
  %159 = vst.msk [vmem:[#allocation3 + $0x100] sm:$0xff] %vm126, %v122
  %160 = vst.msk [vmem:[#allocation3 + $0x108] sm:$0xff] %vm126, %v123
  %161 = vst.msk [vmem:[#allocation3 + $0x110] sm:$0xff] %vm126, %v124
  %162 = vst.msk [vmem:[#allocation3 + $0x118] sm:$0xff] %vm126, %v125
  %v163 = vld [vmem:[%s3] sm:$0x1]
  %v164 = vld [vmem:[#allocation2] sm:$0xff]
  %v165 = vld [vmem:[#allocation2 + $0x10] sm:$0xff]
  %v166 = vld [vmem:[#allocation2 + $0x20] sm:$0xff]
  %v167 = vld [vmem:[#allocation2 + $0x30] sm:$0xff]
  %v168 = vld [vmem:[#allocation2 + $0x40] sm:$0xff]
  %v169 = vld [vmem:[#allocation2 + $0x50] sm:$0xff]
  %v170 = vld [vmem:[#allocation2 + $0x60] sm:$0xff]
  %v171 = vld [vmem:[#allocation2 + $0x70] sm:$0xff]
  %v172 = vld [vmem:[#allocation2 + $0x90] sm:$0xff]
  %v173 = vld [vmem:[#allocation2 + $0xa0] sm:$0xff]
  %v174 = vld [vmem:[#allocation2 + $0xb0] sm:$0xff]
  %v175 = vld [vmem:[#allocation2 + $0xc0] sm:$0xff]
  %v176 = vld [vmem:[#allocation2 + $0xd0] sm:$0xff]
  %v177 = vld [vmem:[#allocation2 + $0xe0] sm:$0xff]
  %v178 = vld [vmem:[#allocation2 + $0xf0] sm:$0xff]
  %v179 = vld [vmem:[#allocation2 + $0x100] sm:$0xff]
  %v180 = vld [vmem:[#allocation3] sm:$0xff]
  %v181 = vld [vmem:[#allocation3 + $0x10] sm:$0xff]
  %v182 = vld [vmem:[#allocation3 + $0x20] sm:$0xff]
  %v183 = vld [vmem:[#allocation3 + $0x30] sm:$0xff]
  %v184 = vld [vmem:[#allocation3 + $0x40] sm:$0xff]
  %v185 = vld [vmem:[#allocation3 + $0x50] sm:$0xff]
  %v186 = vld [vmem:[#allocation3 + $0x60] sm:$0xff]
  %v187 = vld [vmem:[#allocation3 + $0x70] sm:$0xff]
  %v188 = vld [vmem:[#allocation3 + $0x90] sm:$0xff]
  %v189 = vld [vmem:[#allocation3 + $0xa0] sm:$0xff]
  %v190 = vld [vmem:[#allocation3 + $0xb0] sm:$0xff]
  %v191 = vld [vmem:[#allocation3 + $0xc0] sm:$0xff]
  %v192 = vld [vmem:[#allocation3 + $0xd0] sm:$0xff]
  %v193 = vld [vmem:[#allocation3 + $0xe0] sm:$0xff]
  %v194 = vld [vmem:[#allocation3 + $0xf0] sm:$0xff]
  %v195 = vld [vmem:[#allocation3 + $0x100] sm:$0xff]
  %v196 = vld [vmem:[%s1] sm:$0xff]
  %v197 = vld [vmem:[%s2] sm:$0xf]
  %v199 = vsel %vm126, %v180, 0
  %v202 = vsel %vm126, %v181, 0
  %v205 = vsel %vm126, %v182, 0
  %v208 = vsel %vm126, %v183, 0
  %v211 = vsel %vm126, %v184, 0
  %v214 = vsel %vm126, %v185, 0
  %v217 = vsel %vm126, %v186, 0
  %v220 = vsel %vm126, %v187, 0
  %v223 = vsel %vm126, %v188, 0
  %v226 = vsel %vm126, %v189, 0
  %v229 = vsel %vm126, %v190, 0
  %v232 = vsel %vm126, %v191, 0
  %v235 = vsel %vm126, %v192, 0
  %v238 = vsel %vm126, %v193, 0
  %v241 = vsel %vm126, %v194, 0
  %v244 = vsel %vm126, %v195, 0
  %vm246 = vcmask 1043456
  %v248 = vsel %vm246, %v197, 0
  %250 = vmatpush.msra.mxu0 0.0
  %251 = vmatpush.msra.mxu0 0.0
  %252 = vmatpush.msra.mxu0 0.0
  %253 = vmatpush.msra.mxu0 0.0
  %254 = vmatpush.msra.mxu0 0.0
  %255 = vmatpush.msra.mxu0 0.0
  %256 = vmatpush.msra.mxu0 0.0
  %257 = vmatpush.msra.mxu0 0.0
  %258 = vmatpush.msra.mxu0 0.0
  %259 = vmatpush.msra.mxu0 0.0
  %260 = vmatpush.msra.mxu0 0.0
  %261 = vmatpush.msra.mxu0 0.0
  %262 = vmatpush.msra.mxu0 0.0
  %263 = vmatpush.msra.mxu0 0.0
  %264 = vmatpush.msra.mxu0 0.0
  %265 = vmatpush.msra.mxu0 %v248
  %266 = vmatmul.f32.gmra.mxu0 %v199
  %v267 = vpop.f32.mrf.mxu0
  %v268 = vadd.f32 0.0, %v267
  %269 = vmatmul.f32.gmra.mxu0 %v202
  %v270 = vpop.f32.mrf.mxu0
  %v271 = vadd.f32 0.0, %v270
  %272 = vmatmul.f32.gmra.mxu0 %v205
  %v273 = vpop.f32.mrf.mxu0
  %v274 = vadd.f32 0.0, %v273
  %275 = vmatmul.f32.gmra.mxu0 %v208
  %v276 = vpop.f32.mrf.mxu0
  %v277 = vadd.f32 0.0, %v276
  %278 = vmatmul.f32.gmra.mxu0 %v211
  %v279 = vpop.f32.mrf.mxu0
  %v280 = vadd.f32 0.0, %v279
  %281 = vmatmul.f32.gmra.mxu0 %v214
  %v282 = vpop.f32.mrf.mxu0
  %v283 = vadd.f32 0.0, %v282
  %284 = vmatmul.f32.gmra.mxu0 %v217
  %v285 = vpop.f32.mrf.mxu0
  %v286 = vadd.f32 0.0, %v285
  %287 = vmatmul.f32.gmra.mxu0 %v220
  %v288 = vpop.f32.mrf.mxu0
  %v289 = vadd.f32 0.0, %v288
  %290 = vmatmul.f32.gmra.mxu0 %v223
  %v291 = vpop.f32.mrf.mxu0
  %v292 = vadd.f32 0.0, %v291
  %293 = vmatmul.f32.gmra.mxu0 %v226
  %v294 = vpop.f32.mrf.mxu0
  %v295 = vadd.f32 0.0, %v294
  %296 = vmatmul.f32.gmra.mxu0 %v229
  %v297 = vpop.f32.mrf.mxu0
  %v298 = vadd.f32 0.0, %v297
  %299 = vmatmul.f32.gmra.mxu0 %v232
  %v300 = vpop.f32.mrf.mxu0
  %v301 = vadd.f32 0.0, %v300
  %302 = vmatmul.f32.gmra.mxu0 %v235
  %v303 = vpop.f32.mrf.mxu0
  %v304 = vadd.f32 0.0, %v303
  %305 = vmatmul.f32.gmra.mxu0 %v238
  %v306 = vpop.f32.mrf.mxu0
  %v307 = vadd.f32 0.0, %v306
  %308 = vmatmul.f32.gmra.mxu0 %v241
  %v309 = vpop.f32.mrf.mxu0
  %v310 = vadd.f32 0.0, %v309
  %311 = vmatmul.f32.gmra.mxu0 %v244
  %v312 = vpop.f32.mrf.mxu0
  %v313 = vadd.f32 0.0, %v312
  %314 = vdwg.mxu0
  %v316 = vsel %vm53, %v164, 0
  %v319 = vsel %vm53, %v165, 0
  %v322 = vsel %vm53, %v166, 0
  %v325 = vsel %vm53, %v167, 0
  %v328 = vsel %vm53, %v168, 0
  %v331 = vsel %vm53, %v169, 0
  %v334 = vsel %vm53, %v170, 0
  %v337 = vsel %vm53, %v171, 0
  %v340 = vsel %vm53, %v172, 0
  %v343 = vsel %vm53, %v173, 0
  %v346 = vsel %vm53, %v174, 0
  %v349 = vsel %vm53, %v175, 0
  %v352 = vsel %vm53, %v176, 0
  %v355 = vsel %vm53, %v177, 0
  %v358 = vsel %vm53, %v178, 0
  %v361 = vsel %vm53, %v179, 0
  %363 = vmatpush.msra.mxu0 0.0
  %364 = vmatpush.msra.mxu0 0.0
  %365 = vmatpush.msra.mxu0 0.0
  %366 = vmatpush.msra.mxu0 0.0
  %367 = vmatpush.msra.mxu0 0.0
  %368 = vmatpush.msra.mxu0 0.0
  %369 = vmatpush.msra.mxu0 0.0
  %370 = vmatpush.msra.mxu0 0.0
  %371 = vmatpush.msra.mxu0 0.0
  %372 = vmatpush.msra.mxu0 0.0
  %373 = vmatpush.msra.mxu0 0.0
  %374 = vmatpush.msra.mxu0 0.0
  %375 = vmatpush.msra.mxu0 0.0
  %376 = vmatpush.msra.mxu0 0.0
  %377 = vmatpush.msra.mxu0 0.0
  %378 = vmatpush.msra.mxu0 %v196
  %379 = vmatmul.f32.gmra.mxu0 %v316
  %v380 = vpop.f32.mrf.mxu0
  %v381 = vadd.f32 %v268, %v380
  %382 = vmatmul.f32.gmra.mxu0 %v319
  %v383 = vpop.f32.mrf.mxu0
  %v384 = vadd.f32 %v271, %v383
  %385 = vmatmul.f32.gmra.mxu0 %v322
  %v386 = vpop.f32.mrf.mxu0
  %v387 = vadd.f32 %v274, %v386
  %388 = vmatmul.f32.gmra.mxu0 %v325
  %v389 = vpop.f32.mrf.mxu0
  %v390 = vadd.f32 %v277, %v389
  %391 = vmatmul.f32.gmra.mxu0 %v328
  %v392 = vpop.f32.mrf.mxu0
  %v393 = vadd.f32 %v280, %v392
  %394 = vmatmul.f32.gmra.mxu0 %v331
  %v395 = vpop.f32.mrf.mxu0
  %v396 = vadd.f32 %v283, %v395
  %397 = vmatmul.f32.gmra.mxu0 %v334
  %v398 = vpop.f32.mrf.mxu0
  %v399 = vadd.f32 %v286, %v398
  %400 = vmatmul.f32.gmra.mxu0 %v337
  %v401 = vpop.f32.mrf.mxu0
  %v402 = vadd.f32 %v289, %v401
  %403 = vmatmul.f32.gmra.mxu0 %v340
  %v404 = vpop.f32.mrf.mxu0
  %v405 = vadd.f32 %v292, %v404
  %406 = vmatmul.f32.gmra.mxu0 %v343
  %v407 = vpop.f32.mrf.mxu0
  %v408 = vadd.f32 %v295, %v407
  %409 = vmatmul.f32.gmra.mxu0 %v346
  %v410 = vpop.f32.mrf.mxu0
  %v411 = vadd.f32 %v298, %v410
  %412 = vmatmul.f32.gmra.mxu0 %v349
  %v413 = vpop.f32.mrf.mxu0
  %v414 = vadd.f32 %v301, %v413
  %415 = vmatmul.f32.gmra.mxu0 %v352
  %v416 = vpop.f32.mrf.mxu0
  %v417 = vadd.f32 %v304, %v416
  %418 = vmatmul.f32.gmra.mxu0 %v355
  %v419 = vpop.f32.mrf.mxu0
  %v420 = vadd.f32 %v307, %v419
  %421 = vmatmul.f32.gmra.mxu0 %v358
  %v422 = vpop.f32.mrf.mxu0
  %v423 = vadd.f32 %v310, %v422
  %424 = vmatmul.f32.gmra.mxu0 %v361
  %v425 = vpop.f32.mrf.mxu0
  %v426 = vadd.f32 %v313, %v425
  %427 = vdwg.mxu0
  %s428 = scalar_lea.vmem [#allocation2], 8
  %v429 = vld [vmem:[%s428] sm:$0xff]
  %v430 = vld [vmem:[%s428 + $0x10] sm:$0xff]
  %v431 = vld [vmem:[%s428 + $0x20] sm:$0xff]
  %v432 = vld [vmem:[%s428 + $0x30] sm:$0xff]
  %v433 = vld [vmem:[%s428 + $0x40] sm:$0xff]
  %v434 = vld [vmem:[%s428 + $0x50] sm:$0xff]
  %v435 = vld [vmem:[%s428 + $0x60] sm:$0xff]
  %v436 = vld [vmem:[%s428 + $0x70] sm:$0xff]
  %v437 = vld [vmem:[%s428 + $0x90] sm:$0xff]
  %v438 = vld [vmem:[%s428 + $0xa0] sm:$0xff]
  %v439 = vld [vmem:[%s428 + $0xb0] sm:$0xff]
  %v440 = vld [vmem:[%s428 + $0xc0] sm:$0xff]
  %v441 = vld [vmem:[%s428 + $0xd0] sm:$0xff]
  %v442 = vld [vmem:[%s428 + $0xe0] sm:$0xff]
  %v443 = vld [vmem:[%s428 + $0xf0] sm:$0xff]
  %v444 = vld [vmem:[%s428 + $0x100] sm:$0xff]
  %s445 = scalar_lea.vmem [#allocation3], 8
  %v446 = vld [vmem:[%s445] sm:$0xff]
  %v447 = vld [vmem:[%s445 + $0x10] sm:$0xff]
  %v448 = vld [vmem:[%s445 + $0x20] sm:$0xff]
  %v449 = vld [vmem:[%s445 + $0x30] sm:$0xff]
  %v450 = vld [vmem:[%s445 + $0x40] sm:$0xff]
  %v451 = vld [vmem:[%s445 + $0x50] sm:$0xff]
  %v452 = vld [vmem:[%s445 + $0x60] sm:$0xff]
  %v453 = vld [vmem:[%s445 + $0x70] sm:$0xff]
  %v454 = vld [vmem:[%s445 + $0x90] sm:$0xff]
  %v455 = vld [vmem:[%s445 + $0xa0] sm:$0xff]
  %v456 = vld [vmem:[%s445 + $0xb0] sm:$0xff]
  %v457 = vld [vmem:[%s445 + $0xc0] sm:$0xff]
  %v458 = vld [vmem:[%s445 + $0xd0] sm:$0xff]
  %v459 = vld [vmem:[%s445 + $0xe0] sm:$0xff]
  %v460 = vld [vmem:[%s445 + $0xf0] sm:$0xff]
  %v461 = vld [vmem:[%s445 + $0x100] sm:$0xff]
  %s462 = scalar_lea.vmem %s1, 8
  %v463 = vld [vmem:[%s462] sm:$0xff]
  %s464 = scalar_lea.vmem %s2, 4
  %v465 = vld [vmem:[%s464] sm:$0xf]
  %v467 = vsel %vm126, %v446, 0
  %v470 = vsel %vm126, %v447, 0
  %v473 = vsel %vm126, %v448, 0
  %v476 = vsel %vm126, %v449, 0
  %v479 = vsel %vm126, %v450, 0
  %v482 = vsel %vm126, %v451, 0
  %v485 = vsel %vm126, %v452, 0
  %v488 = vsel %vm126, %v453, 0
  %v491 = vsel %vm126, %v454, 0
  %v494 = vsel %vm126, %v455, 0
  %v497 = vsel %vm126, %v456, 0
  %v500 = vsel %vm126, %v457, 0
  %v503 = vsel %vm126, %v458, 0
  %v506 = vsel %vm126, %v459, 0
  %v509 = vsel %vm126, %v460, 0
  %v512 = vsel %vm126, %v461, 0
  %v515 = vsel %vm246, %v465, 0
  %517 = vmatpush.msra.mxu0 0.0
  %518 = vmatpush.msra.mxu0 0.0
  %519 = vmatpush.msra.mxu0 0.0
  %520 = vmatpush.msra.mxu0 0.0
  %521 = vmatpush.msra.mxu0 0.0
  %522 = vmatpush.msra.mxu0 0.0
  %523 = vmatpush.msra.mxu0 0.0
  %524 = vmatpush.msra.mxu0 0.0
  %525 = vmatpush.msra.mxu0 0.0
  %526 = vmatpush.msra.mxu0 0.0
  %527 = vmatpush.msra.mxu0 0.0
  %528 = vmatpush.msra.mxu0 0.0
  %529 = vmatpush.msra.mxu0 0.0
  %530 = vmatpush.msra.mxu0 0.0
  %531 = vmatpush.msra.mxu0 0.0
  %532 = vmatpush.msra.mxu0 %v515
  %533 = vmatmul.f32.gmra.mxu0 %v467
  %v534 = vpop.f32.mrf.mxu0
  %v535 = vadd.f32 0.0, %v534
  %536 = vmatmul.f32.gmra.mxu0 %v470
  %v537 = vpop.f32.mrf.mxu0
  %v538 = vadd.f32 0.0, %v537
  %539 = vmatmul.f32.gmra.mxu0 %v473
  %v540 = vpop.f32.mrf.mxu0
  %v541 = vadd.f32 0.0, %v540
  %542 = vmatmul.f32.gmra.mxu0 %v476
  %v543 = vpop.f32.mrf.mxu0
  %v544 = vadd.f32 0.0, %v543
  %545 = vmatmul.f32.gmra.mxu0 %v479
  %v546 = vpop.f32.mrf.mxu0
  %v547 = vadd.f32 0.0, %v546
  %548 = vmatmul.f32.gmra.mxu0 %v482
  %v549 = vpop.f32.mrf.mxu0
  %v550 = vadd.f32 0.0, %v549
  %551 = vmatmul.f32.gmra.mxu0 %v485
  %v552 = vpop.f32.mrf.mxu0
  %v553 = vadd.f32 0.0, %v552
  %554 = vmatmul.f32.gmra.mxu0 %v488
  %v555 = vpop.f32.mrf.mxu0
  %v556 = vadd.f32 0.0, %v555
  %557 = vmatmul.f32.gmra.mxu0 %v491
  %v558 = vpop.f32.mrf.mxu0
  %v559 = vadd.f32 0.0, %v558
  %560 = vmatmul.f32.gmra.mxu0 %v494
  %v561 = vpop.f32.mrf.mxu0
  %v562 = vadd.f32 0.0, %v561
  %563 = vmatmul.f32.gmra.mxu0 %v497
  %v564 = vpop.f32.mrf.mxu0
  %v565 = vadd.f32 0.0, %v564
  %566 = vmatmul.f32.gmra.mxu0 %v500
  %v567 = vpop.f32.mrf.mxu0
  %v568 = vadd.f32 0.0, %v567
  %569 = vmatmul.f32.gmra.mxu0 %v503
  %v570 = vpop.f32.mrf.mxu0
  %v571 = vadd.f32 0.0, %v570
  %572 = vmatmul.f32.gmra.mxu0 %v506
  %v573 = vpop.f32.mrf.mxu0
  %v574 = vadd.f32 0.0, %v573
  %575 = vmatmul.f32.gmra.mxu0 %v509
  %v576 = vpop.f32.mrf.mxu0
  %v577 = vadd.f32 0.0, %v576
  %578 = vmatmul.f32.gmra.mxu0 %v512
  %v579 = vpop.f32.mrf.mxu0
  %v580 = vadd.f32 0.0, %v579
  %581 = vdwg.mxu0
  %v583 = vsel %vm53, %v429, 0
  %v586 = vsel %vm53, %v430, 0
  %v589 = vsel %vm53, %v431, 0
  %v592 = vsel %vm53, %v432, 0
  %v595 = vsel %vm53, %v433, 0
  %v598 = vsel %vm53, %v434, 0
  %v601 = vsel %vm53, %v435, 0
  %v604 = vsel %vm53, %v436, 0
  %v607 = vsel %vm53, %v437, 0
  %v610 = vsel %vm53, %v438, 0
  %v613 = vsel %vm53, %v439, 0
  %v616 = vsel %vm53, %v440, 0
  %v619 = vsel %vm53, %v441, 0
  %v622 = vsel %vm53, %v442, 0
  %v625 = vsel %vm53, %v443, 0
  %v628 = vsel %vm53, %v444, 0
  %630 = vmatpush.msra.mxu0 0.0
  %631 = vmatpush.msra.mxu0 0.0
  %632 = vmatpush.msra.mxu0 0.0
  %633 = vmatpush.msra.mxu0 0.0
  %634 = vmatpush.msra.mxu0 0.0
  %635 = vmatpush.msra.mxu0 0.0
  %636 = vmatpush.msra.mxu0 0.0
  %637 = vmatpush.msra.mxu0 0.0
  %638 = vmatpush.msra.mxu0 0.0
  %639 = vmatpush.msra.mxu0 0.0
  %640 = vmatpush.msra.mxu0 0.0
  %641 = vmatpush.msra.mxu0 0.0
  %642 = vmatpush.msra.mxu0 0.0
  %643 = vmatpush.msra.mxu0 0.0
  %644 = vmatpush.msra.mxu0 0.0
  %645 = vmatpush.msra.mxu0 %v463
  %646 = vmatmul.f32.gmra.mxu0 %v583
  %v647 = vpop.f32.mrf.mxu0
  %v648 = vadd.f32 %v535, %v647
  %649 = vmatmul.f32.gmra.mxu0 %v586
  %v650 = vpop.f32.mrf.mxu0
  %v651 = vadd.f32 %v538, %v650
  %652 = vmatmul.f32.gmra.mxu0 %v589
  %v653 = vpop.f32.mrf.mxu0
  %v654 = vadd.f32 %v541, %v653
  %655 = vmatmul.f32.gmra.mxu0 %v592
  %v656 = vpop.f32.mrf.mxu0
  %v657 = vadd.f32 %v544, %v656
  %658 = vmatmul.f32.gmra.mxu0 %v595
  %v659 = vpop.f32.mrf.mxu0
  %v660 = vadd.f32 %v547, %v659
  %661 = vmatmul.f32.gmra.mxu0 %v598
  %v662 = vpop.f32.mrf.mxu0
  %v663 = vadd.f32 %v550, %v662
  %664 = vmatmul.f32.gmra.mxu0 %v601
  %v665 = vpop.f32.mrf.mxu0
  %v666 = vadd.f32 %v553, %v665
  %667 = vmatmul.f32.gmra.mxu0 %v604
  %v668 = vpop.f32.mrf.mxu0
  %v669 = vadd.f32 %v556, %v668
  %670 = vmatmul.f32.gmra.mxu0 %v607
  %v671 = vpop.f32.mrf.mxu0
  %v672 = vadd.f32 %v559, %v671
  %673 = vmatmul.f32.gmra.mxu0 %v610
  %v674 = vpop.f32.mrf.mxu0
  %v675 = vadd.f32 %v562, %v674
  %676 = vmatmul.f32.gmra.mxu0 %v613
  %v677 = vpop.f32.mrf.mxu0
  %v678 = vadd.f32 %v565, %v677
  %679 = vmatmul.f32.gmra.mxu0 %v616
  %v680 = vpop.f32.mrf.mxu0
  %v681 = vadd.f32 %v568, %v680
  %682 = vmatmul.f32.gmra.mxu0 %v619
  %v683 = vpop.f32.mrf.mxu0
  %v684 = vadd.f32 %v571, %v683
  %685 = vmatmul.f32.gmra.mxu0 %v622
  %v686 = vpop.f32.mrf.mxu0
  %v687 = vadd.f32 %v574, %v686
  %688 = vmatmul.f32.gmra.mxu0 %v625
  %v689 = vpop.f32.mrf.mxu0
  %v690 = vadd.f32 %v577, %v689
  %691 = vmatmul.f32.gmra.mxu0 %v628
  %v692 = vpop.f32.mrf.mxu0
  %v693 = vadd.f32 %v580, %v692
  %694 = vdwg.mxu0
  %v695 = vadd.f32 %v381, %v648
  %v696 = vadd.f32 %v384, %v651
  %v697 = vadd.f32 %v387, %v654
  %v698 = vadd.f32 %v390, %v657
  %v699 = vadd.f32 %v393, %v660
  %v700 = vadd.f32 %v396, %v663
  %v701 = vadd.f32 %v399, %v666
  %v702 = vadd.f32 %v402, %v669
  %v703 = vadd.f32 %v405, %v672
  %v704 = vadd.f32 %v408, %v675
  %v705 = vadd.f32 %v411, %v678
  %v706 = vadd.f32 %v414, %v681
  %v707 = vadd.f32 %v417, %v684
  %v708 = vadd.f32 %v420, %v687
  %v709 = vadd.f32 %v423, %v690
  %v710 = vadd.f32 %v426, %v693
  %s711 = scalar_lea.vmem [#allocation2], 16
  %v712 = vld [vmem:[%s711] sm:$0xff]
  %v713 = vld [vmem:[%s711 + $0x10] sm:$0xff]
  %v714 = vld [vmem:[%s711 + $0x20] sm:$0xff]
  %v715 = vld [vmem:[%s711 + $0x30] sm:$0xff]
  %v716 = vld [vmem:[%s711 + $0x40] sm:$0xff]
  %v717 = vld [vmem:[%s711 + $0x50] sm:$0xff]
  %v718 = vld [vmem:[%s711 + $0x60] sm:$0xff]
  %v719 = vld [vmem:[%s711 + $0x70] sm:$0xff]
  %v720 = vld [vmem:[%s711 + $0x90] sm:$0xff]
  %v721 = vld [vmem:[%s711 + $0xa0] sm:$0xff]
  %v722 = vld [vmem:[%s711 + $0xb0] sm:$0xff]
  %v723 = vld [vmem:[%s711 + $0xc0] sm:$0xff]
  %v724 = vld [vmem:[%s711 + $0xd0] sm:$0xff]
  %v725 = vld [vmem:[%s711 + $0xe0] sm:$0xff]
  %v726 = vld [vmem:[%s711 + $0xf0] sm:$0xff]
  %v727 = vld [vmem:[%s711 + $0x100] sm:$0xff]
  %s728 = scalar_lea.vmem [#allocation3], 16
  %v729 = vld [vmem:[%s728] sm:$0xff]
  %v730 = vld [vmem:[%s728 + $0x10] sm:$0xff]
  %v731 = vld [vmem:[%s728 + $0x20] sm:$0xff]
  %v732 = vld [vmem:[%s728 + $0x30] sm:$0xff]
  %v733 = vld [vmem:[%s728 + $0x40] sm:$0xff]
  %v734 = vld [vmem:[%s728 + $0x50] sm:$0xff]
  %v735 = vld [vmem:[%s728 + $0x60] sm:$0xff]
  %v736 = vld [vmem:[%s728 + $0x70] sm:$0xff]
  %v737 = vld [vmem:[%s728 + $0x90] sm:$0xff]
  %v738 = vld [vmem:[%s728 + $0xa0] sm:$0xff]
  %v739 = vld [vmem:[%s728 + $0xb0] sm:$0xff]
  %v740 = vld [vmem:[%s728 + $0xc0] sm:$0xff]
  %v741 = vld [vmem:[%s728 + $0xd0] sm:$0xff]
  %v742 = vld [vmem:[%s728 + $0xe0] sm:$0xff]
  %v743 = vld [vmem:[%s728 + $0xf0] sm:$0xff]
  %v744 = vld [vmem:[%s728 + $0x100] sm:$0xff]
  %s745 = scalar_lea.vmem %s1, 16
  %v746 = vld [vmem:[%s745] sm:$0xff]
  %s747 = scalar_lea.vmem %s2, 8
  %v748 = vld [vmem:[%s747] sm:$0xf]
  %v750 = vsel %vm126, %v729, 0
  %v753 = vsel %vm126, %v730, 0
  %v756 = vsel %vm126, %v731, 0
  %v759 = vsel %vm126, %v732, 0
  %v762 = vsel %vm126, %v733, 0
  %v765 = vsel %vm126, %v734, 0
  %v768 = vsel %vm126, %v735, 0
  %v771 = vsel %vm126, %v736, 0
  %v774 = vsel %vm126, %v737, 0
  %v777 = vsel %vm126, %v738, 0
  %v780 = vsel %vm126, %v739, 0
  %v783 = vsel %vm126, %v740, 0
  %v786 = vsel %vm126, %v741, 0
  %v789 = vsel %vm126, %v742, 0
  %v792 = vsel %vm126, %v743, 0
  %v795 = vsel %vm126, %v744, 0
  %v798 = vsel %vm246, %v748, 0
  %800 = vmatpush.msra.mxu0 0.0
  %801 = vmatpush.msra.mxu0 0.0
  %802 = vmatpush.msra.mxu0 0.0
  %803 = vmatpush.msra.mxu0 0.0
  %804 = vmatpush.msra.mxu0 0.0
  %805 = vmatpush.msra.mxu0 0.0
  %806 = vmatpush.msra.mxu0 0.0
  %807 = vmatpush.msra.mxu0 0.0
  %808 = vmatpush.msra.mxu0 0.0
  %809 = vmatpush.msra.mxu0 0.0
  %810 = vmatpush.msra.mxu0 0.0
  %811 = vmatpush.msra.mxu0 0.0
  %812 = vmatpush.msra.mxu0 0.0
  %813 = vmatpush.msra.mxu0 0.0
  %814 = vmatpush.msra.mxu0 0.0
  %815 = vmatpush.msra.mxu0 %v798
  %816 = vmatmul.f32.gmra.mxu0 %v750
  %v817 = vpop.f32.mrf.mxu0
  %v818 = vadd.f32 0.0, %v817
  %819 = vmatmul.f32.gmra.mxu0 %v753
  %v820 = vpop.f32.mrf.mxu0
  %v821 = vadd.f32 0.0, %v820
  %822 = vmatmul.f32.gmra.mxu0 %v756
  %v823 = vpop.f32.mrf.mxu0
  %v824 = vadd.f32 0.0, %v823
  %825 = vmatmul.f32.gmra.mxu0 %v759
  %v826 = vpop.f32.mrf.mxu0
  %v827 = vadd.f32 0.0, %v826
  %828 = vmatmul.f32.gmra.mxu0 %v762
  %v829 = vpop.f32.mrf.mxu0
  %v830 = vadd.f32 0.0, %v829
  %831 = vmatmul.f32.gmra.mxu0 %v765
  %v832 = vpop.f32.mrf.mxu0
  %v833 = vadd.f32 0.0, %v832
  %834 = vmatmul.f32.gmra.mxu0 %v768
  %v835 = vpop.f32.mrf.mxu0
  %v836 = vadd.f32 0.0, %v835
  %837 = vmatmul.f32.gmra.mxu0 %v771
  %v838 = vpop.f32.mrf.mxu0
  %v839 = vadd.f32 0.0, %v838
  %840 = vmatmul.f32.gmra.mxu0 %v774
  %v841 = vpop.f32.mrf.mxu0
  %v842 = vadd.f32 0.0, %v841
  %843 = vmatmul.f32.gmra.mxu0 %v777
  %v844 = vpop.f32.mrf.mxu0
  %v845 = vadd.f32 0.0, %v844
  %846 = vmatmul.f32.gmra.mxu0 %v780
  %v847 = vpop.f32.mrf.mxu0
  %v848 = vadd.f32 0.0, %v847
  %849 = vmatmul.f32.gmra.mxu0 %v783
  %v850 = vpop.f32.mrf.mxu0
  %v851 = vadd.f32 0.0, %v850
  %852 = vmatmul.f32.gmra.mxu0 %v786
  %v853 = vpop.f32.mrf.mxu0
  %v854 = vadd.f32 0.0, %v853
  %855 = vmatmul.f32.gmra.mxu0 %v789
  %v856 = vpop.f32.mrf.mxu0
  %v857 = vadd.f32 0.0, %v856
  %858 = vmatmul.f32.gmra.mxu0 %v792
  %v859 = vpop.f32.mrf.mxu0
  %v860 = vadd.f32 0.0, %v859
  %861 = vmatmul.f32.gmra.mxu0 %v795
  %v862 = vpop.f32.mrf.mxu0
  %v863 = vadd.f32 0.0, %v862
  %864 = vdwg.mxu0
  %v866 = vsel %vm53, %v712, 0
  %v869 = vsel %vm53, %v713, 0
  %v872 = vsel %vm53, %v714, 0
  %v875 = vsel %vm53, %v715, 0
  %v878 = vsel %vm53, %v716, 0
  %v881 = vsel %vm53, %v717, 0
  %v884 = vsel %vm53, %v718, 0
  %v887 = vsel %vm53, %v719, 0
  %v890 = vsel %vm53, %v720, 0
  %v893 = vsel %vm53, %v721, 0
  %v896 = vsel %vm53, %v722, 0
  %v899 = vsel %vm53, %v723, 0
  %v902 = vsel %vm53, %v724, 0
  %v905 = vsel %vm53, %v725, 0
  %v908 = vsel %vm53, %v726, 0
  %v911 = vsel %vm53, %v727, 0
  %913 = vmatpush.msra.mxu0 0.0
  %914 = vmatpush.msra.mxu0 0.0
  %915 = vmatpush.msra.mxu0 0.0
  %916 = vmatpush.msra.mxu0 0.0
  %917 = vmatpush.msra.mxu0 0.0
  %918 = vmatpush.msra.mxu0 0.0
  %919 = vmatpush.msra.mxu0 0.0
  %920 = vmatpush.msra.mxu0 0.0
  %921 = vmatpush.msra.mxu0 0.0
  %922 = vmatpush.msra.mxu0 0.0
  %923 = vmatpush.msra.mxu0 0.0
  %924 = vmatpush.msra.mxu0 0.0
  %925 = vmatpush.msra.mxu0 0.0
  %926 = vmatpush.msra.mxu0 0.0
  %927 = vmatpush.msra.mxu0 0.0
  %928 = vmatpush.msra.mxu0 %v746
  %929 = vmatmul.f32.gmra.mxu0 %v866
  %v930 = vpop.f32.mrf.mxu0
  %v931 = vadd.f32 %v818, %v930
  %932 = vmatmul.f32.gmra.mxu0 %v869
  %v933 = vpop.f32.mrf.mxu0
  %v934 = vadd.f32 %v821, %v933
  %935 = vmatmul.f32.gmra.mxu0 %v872
  %v936 = vpop.f32.mrf.mxu0
  %v937 = vadd.f32 %v824, %v936
  %938 = vmatmul.f32.gmra.mxu0 %v875
  %v939 = vpop.f32.mrf.mxu0
  %v940 = vadd.f32 %v827, %v939
  %941 = vmatmul.f32.gmra.mxu0 %v878
  %v942 = vpop.f32.mrf.mxu0
  %v943 = vadd.f32 %v830, %v942
  %944 = vmatmul.f32.gmra.mxu0 %v881
  %v945 = vpop.f32.mrf.mxu0
  %v946 = vadd.f32 %v833, %v945
  %947 = vmatmul.f32.gmra.mxu0 %v884
  %v948 = vpop.f32.mrf.mxu0
  %v949 = vadd.f32 %v836, %v948
  %950 = vmatmul.f32.gmra.mxu0 %v887
  %v951 = vpop.f32.mrf.mxu0
  %v952 = vadd.f32 %v839, %v951
  %953 = vmatmul.f32.gmra.mxu0 %v890
  %v954 = vpop.f32.mrf.mxu0
  %v955 = vadd.f32 %v842, %v954
  %956 = vmatmul.f32.gmra.mxu0 %v893
  %v957 = vpop.f32.mrf.mxu0
  %v958 = vadd.f32 %v845, %v957
  %959 = vmatmul.f32.gmra.mxu0 %v896
  %v960 = vpop.f32.mrf.mxu0
  %v961 = vadd.f32 %v848, %v960
  %962 = vmatmul.f32.gmra.mxu0 %v899
  %v963 = vpop.f32.mrf.mxu0
  %v964 = vadd.f32 %v851, %v963
  %965 = vmatmul.f32.gmra.mxu0 %v902
  %v966 = vpop.f32.mrf.mxu0
  %v967 = vadd.f32 %v854, %v966
  %968 = vmatmul.f32.gmra.mxu0 %v905
  %v969 = vpop.f32.mrf.mxu0
  %v970 = vadd.f32 %v857, %v969
  %971 = vmatmul.f32.gmra.mxu0 %v908
  %v972 = vpop.f32.mrf.mxu0
  %v973 = vadd.f32 %v860, %v972
  %974 = vmatmul.f32.gmra.mxu0 %v911
  %v975 = vpop.f32.mrf.mxu0
  %v976 = vadd.f32 %v863, %v975
  %977 = vdwg.mxu0
  %v978 = vadd.f32 %v695, %v931
  %v979 = vadd.f32 %v696, %v934
  %v980 = vadd.f32 %v697, %v937
  %v981 = vadd.f32 %v698, %v940
  %v982 = vadd.f32 %v699, %v943
  %v983 = vadd.f32 %v700, %v946
  %v984 = vadd.f32 %v701, %v949
  %v985 = vadd.f32 %v702, %v952
  %v986 = vadd.f32 %v703, %v955
  %v987 = vadd.f32 %v704, %v958
  %v988 = vadd.f32 %v705, %v961
  %v989 = vadd.f32 %v706, %v964
  %v990 = vadd.f32 %v707, %v967
  %v991 = vadd.f32 %v708, %v970
  %v992 = vadd.f32 %v709, %v973
  %v993 = vadd.f32 %v710, %v976
  %v995 = vperm.slane %v163, 0
  %v997 = vadd.f32 %v978, %v995
  %v998 = vadd.f32 %v979, %v995
  %v999 = vadd.f32 %v980, %v995
  %v1000 = vadd.f32 %v981, %v995
  %v1001 = vadd.f32 %v982, %v995
  %v1002 = vadd.f32 %v983, %v995
  %v1003 = vadd.f32 %v984, %v995
  %v1004 = vadd.f32 %v985, %v995
  %v1005 = vadd.f32 %v986, %v995
  %v1006 = vadd.f32 %v987, %v995
  %v1007 = vadd.f32 %v988, %v995
  %v1008 = vadd.f32 %v989, %v995
  %v1009 = vadd.f32 %v990, %v995
  %v1010 = vadd.f32 %v991, %v995
  %v1011 = vadd.f32 %v992, %v995
  %v1012 = vadd.f32 %v993, %v995
  %1013 = vst [vmem:[%s4] sm:$0xff] %v997
  %1014 = vst [vmem:[%s4 + $0x8] sm:$0xff] %v998
  %1015 = vst [vmem:[%s4 + $0x10] sm:$0xff] %v999
  %1016 = vst [vmem:[%s4 + $0x18] sm:$0xff] %v1000
  %1017 = vst [vmem:[%s4 + $0x20] sm:$0xff] %v1001
  %1018 = vst [vmem:[%s4 + $0x28] sm:$0xff] %v1002
  %1019 = vst [vmem:[%s4 + $0x30] sm:$0xff] %v1003
  %1020 = vst [vmem:[%s4 + $0x38] sm:$0xff] %v1004
  %1021 = vst [vmem:[%s4 + $0x40] sm:$0xff] %v1005
  %1022 = vst [vmem:[%s4 + $0x48] sm:$0xff] %v1006
  %1023 = vst [vmem:[%s4 + $0x50] sm:$0xff] %v1007
  %1024 = vst [vmem:[%s4 + $0x58] sm:$0xff] %v1008
  %1025 = vst [vmem:[%s4 + $0x60] sm:$0xff] %v1009
  %1026 = vst [vmem:[%s4 + $0x68] sm:$0xff] %v1010
  %1027 = vst [vmem:[%s4 + $0x70] sm:$0xff] %v1011
  %1028 = vst [vmem:[%s4 + $0x78] sm:$0xff] %v1012
  // Predicated region
  $region18: #{downsample_conv.1} parent=0 // pred_check
    _
  $region19: #{downsample_conv.1} parent=0 // pred_check_branch
    %1030 = sbr.rel (0) target = $region21
  $region20: #{downsample_conv.1} parent=0 // pred_region
    _
  $region21: #{downsample_conv.1} parent=0 // pred_fallthru
    _
  // Predicated region
  $region22: #{downsample_conv.1} parent=0 // pred_check
    _
  $region23: #{downsample_conv.1} parent=0 // pred_check_branch
    %1032 = sbr.rel (0) target = $region25
  $region24: #{downsample_conv.1} parent=0 // pred_region
    _
  $region25: #{downsample_conv.1} parent=0 // pred_fallthru
    _

</llo_original>
